<compile_context>
chip_gen: v7x
topology: tpu7x:2x2x1
jax: 0.10.0
libtpu: 0.0.40
codegen_flags: <defaults>
</compile_context>

<pallas_src>
import math
import functools

import jax
import jax.numpy as jnp
import numpy as np
from jax.experimental import pallas as pl
from jax.experimental.pallas import tpu as pltpu


def _round_up(x, m):
    return ((x + m - 1) // m) * m


# ----------------------------------------------------------------------------
# Kernels
# ----------------------------------------------------------------------------
def _lsoftmax_train_kernel(x_ref, w_ref, wnorm_ref, xnorm_ref, tgt_ref, out_ref,
                           *, margin, beta, tile_n, c_m_2n, cos_powers, signs,
                           cos_thresholds):
    # Grid-position values are computed ONCE at the top level of the kernel body.
    # (pl.program_id / pl.num_programs must NOT appear inside pl.when branches.)
    kk = pl.program_id(2)
    nk = pl.num_programs(2)
    col0 = pl.program_id(1) * tile_n           # first class id of this C tile

    # ---- hot path: tiled matmul on the MXU, f32 accumulation into the resident output
    @pl.when(kk == 0)
    def _():
        out_ref[...] = jnp.zeros_like(out_ref)

    out_ref[...] += jnp.dot(x_ref[...], w_ref[...],
                            preferred_element_type=jnp.float32)

    # ---- epilogue: only on the final K step, O(tm) math + one masked store
    @pl.when(kk == nk - 1)
    def _():
        logit = out_ref[...]                       # [tm, tn] f32 (full accumulation)
        tm, tn = logit.shape

        # class ids for THIS C tile (offset by the C-tile grid position, hoisted above)
        class_ids = jax.lax.broadcasted_iota(jnp.int32, (tm, tn), 1) + col0
        mask = class_ids == tgt_ref[...]           # [tm, tn] bool

        # per-row gather of the target logit / target weight norm; 0 in C-tiles that do
        # not contain the row's target (benign: the final jnp.where masks them out).
        logit_t = jnp.sum(jnp.where(mask, logit, 0.0), axis=1, keepdims=True)      # [tm,1]
        w_t_norm = jnp.sum(jnp.where(mask, wnorm_ref[...], 0.0), axis=1,
                           keepdims=True)                                           # [tm,1]
        x_norm = xnorm_ref[...]                                                     # [tm,1]

        cos_theta = logit_t / (w_t_norm * x_norm + 1e-10)

        # cos(m*theta) via the binomial expansion (unrolled; all coeffs are static)
        sin2_theta = 1.0 - cos_theta * cos_theta
        cos_m_theta = jnp.zeros_like(cos_theta)
        for n in range(margin // 2 + 1):
            coeff = float(signs[n] * c_m_2n[n])
            cos_m_theta = cos_m_theta + coeff \
                * (cos_theta ** int(cos_powers[n])) * (sin2_theta ** n)

        # k = floor(acos(clamp(cos)) / (pi/m)) via static threshold counting (no acos).
        eps = 1e-7
        cos_c = jnp.clip(cos_theta, -1.0 + eps, 1.0 - eps)
        kf = jnp.zeros_like(cos_theta)
        for thr in cos_thresholds:                 # cos(j*pi/m), j = 1..m-1
            kf = kf + (cos_c <= thr).astype(jnp.float32)

        parity = kf - 2.0 * jnp.floor(kf * 0.5)    # (-1)^k, k integer-valued float
        sign_k = 1.0 - 2.0 * parity

        updated = w_t_norm * x_norm * (sign_k * cos_m_theta - 2.0 * kf)
        blended = (updated + beta * logit_t) / (1.0 + beta)                         # [tm,1]

        # single masked scatter of the blended value into the target column
        out_ref[...] = jnp.where(mask, blended, logit)


def _matmul_kernel(x_ref, w_ref, out_ref):
    kk = pl.program_id(2)

    @pl.when(kk == 0)
    def _():
        out_ref[...] = jnp.zeros_like(out_ref)

    out_ref[...] += jnp.dot(x_ref[...], w_ref[...],
                            preferred_element_type=jnp.float32)


# ----------------------------------------------------------------------------
# Wrapper (parameter setup / padding / glue in plain JAX)
# ----------------------------------------------------------------------------
class LSoftmaxLinearPallas:
    def __init__(self, input_features, output_features, margin, key,
                 compute_dtype=jnp.float32):
        self.input_dim = input_features
        self.output_dim = output_features
        self.margin = margin
        self.beta = 100.0
        self.beta_min = 0.0
        self.scale = 0.99
        self.compute_dtype = compute_dtype   # jnp.float32 (exact) or jnp.bfloat16 (fast MXU)

        # kaiming-normal-ish deterministic init (reset_parameters analogue)
        std = math.sqrt(2.0 / input_features)
        self.weight = (std * jax.random.normal(
            key, (input_features, output_features))).astype(jnp.float32)

        # static coefficient tables (host-side Python floats, baked into the kernel)
        self.C_m_2n = [float(math.comb(margin, j)) for j in range(0, margin + 1, 2)]
        self.cos_powers = list(range(margin, -1, -2))
        self.signs = [1.0 if n % 2 == 0 else -1.0 for n in range(margin // 2 + 1)]
        self.cos_thresholds = [math.cos(j * math.pi / margin)
                               for j in range(1, margin)]

    # ---- tile / padding selection (sized well under 32 MiB scoped VMEM on every gen)
    def _tiles(self, B, D, C):
        tm = min(256, _round_up(B, 16))           # 16-aligned sublanes (bf16-safe)
        tn = min(512, _round_up(C, 128))          # lane-dense output tiles
        tk = min(512, _round_up(D, 128))
        Bp = _round_up(B, tm)
        Cp = _round_up(C, tn)
        Dp = _round_up(D, tk)
        return tm, tn, tk, Bp, Cp, Dp

    def _compiler_params(self):
        return pltpu.CompilerParams(
            dimension_semantics=("parallel", "parallel", "arbitrary"),
            vmem_limit_bytes=64 * 1024 * 1024)

    # ---- eval path: plain tiled matmul
    def _matmul(self, x):
        B, D = x.shape
        C = self.output_dim
        tm, tn, tk, Bp, Cp, Dp = self._tiles(B, D, C)

        xp = jnp.pad(x.astype(self.compute_dtype), ((0, Bp - B), (0, Dp - D)))
        wp = jnp.pad(self.weight.astype(self.compute_dtype),
                     ((0, Dp - D), (0, Cp - C)))

        out = pl.pallas_call(
            _matmul_kernel,
            out_shape=jax.ShapeDtypeStruct((Bp, Cp), jnp.float32),
            grid=(Bp // tm, Cp // tn, Dp // tk),
            in_specs=[pl.BlockSpec((tm, tk), lambda i, j, k: (i, k)),
                      pl.BlockSpec((tk, tn), lambda i, j, k: (k, j))],
            out_specs=pl.BlockSpec((tm, tn), lambda i, j, k: (i, j)),
            compiler_params=self._compiler_params(),
        )(xp, wp)
        return out[:B, :C]

    def __call__(self, x, target=None, training=True):
        if not training:
            return self._matmul(x)

        B, D = x.shape
        C = self.output_dim
        tm, tn, tk, Bp, Cp, Dp = self._tiles(B, D, C)
        beta = float(max(self.beta, self.beta_min))

        xf = x.astype(jnp.float32)
        wf = self.weight

        xp = jnp.pad(xf.astype(self.compute_dtype), ((0, Bp - B), (0, Dp - D)))
        wp = jnp.pad(wf.astype(self.compute_dtype), ((0, Dp - D), (0, Cp - C)))

        # precomputed norms (tiny XLA ops, done once per forward, f32 for accuracy)
        w_norm = jnp.sqrt(jnp.sum(wf * wf, axis=0, keepdims=True))       # [1, C]
        w_norm = jnp.pad(w_norm, ((0, 0), (0, Cp - C)))
        x_norm = jnp.sqrt(jnp.sum(xf * xf, axis=1, keepdims=True))       # [B, 1]
        x_norm = jnp.pad(x_norm, ((0, Bp - B), (0, 0)))

        # TODO(synk): targets could be SMEM scalar-prefetched, but the per-row vector mask
        # needs a VMEM-resident broadcast anyway, so the tiny (tm, 1) int32 VMEM block is kept.
        tgt = jnp.pad(target.astype(jnp.int32), (0, Bp - B)).reshape(Bp, 1)

        kernel = functools.partial(
            _lsoftmax_train_kernel,
            margin=self.margin, beta=beta, tile_n=tn,
            c_m_2n=tuple(self.C_m_2n), cos_powers=tuple(self.cos_powers),
            signs=tuple(self.signs), cos_thresholds=tuple(self.cos_thresholds))

        out = pl.pallas_call(
            kernel,
            out_shape=jax.ShapeDtypeStruct((Bp, Cp), jnp.float32),
            grid=(Bp // tm, Cp // tn, Dp // tk),
            in_specs=[pl.BlockSpec((tm, tk), lambda i, j, k: (i, k)),   # x
                      pl.BlockSpec((tk, tn), lambda i, j, k: (k, j)),   # w
                      pl.BlockSpec((1, tn), lambda i, j, k: (0, j)),    # ||w_c||
                      pl.BlockSpec((tm, 1), lambda i, j, k: (i, 0)),    # ||x_i||
                      pl.BlockSpec((tm, 1), lambda i, j, k: (i, 0))],   # target ids
            out_specs=pl.BlockSpec((tm, tn), lambda i, j, k: (i, j)),
            compiler_params=self._compiler_params(),
        )(xp, wp, w_norm, x_norm, tgt)

        # TODO(synk): PyTorch mutates self.beta *= self.scale each forward; modeled here as
        # host-side Python state (makes the module non-functional if wrapped in jit).
        self.beta *= self.scale
        return out[:B, :C]


# ----------------------------------------------------------------------------
# Pure-JAX reference (mirrors the PyTorch forward) for a sanity check
# ----------------------------------------------------------------------------
def _reference_forward(x, w, target, margin, beta, matmul_dtype=jnp.float32):
    B = x.shape[0]
    logit = jnp.dot(x.astype(matmul_dtype), w.astype(matmul_dtype),
                    preferred_element_type=jnp.float32)
    logit_target = logit[jnp.arange(B), target]
    w_target_norm = jnp.linalg.norm(w[:, target], axis=0)
    x_norm = jnp.linalg.norm(x, axis=1)
    cos_theta = logit_target / (w_target_norm * x_norm + 1e-10)
    sin2_theta = 1.0 - cos_theta ** 2
    cos_m_theta = jnp.zeros_like(cos_theta)
    C_m_2n = [float(math.comb(margin, j)) for j in range(0, margin + 1, 2)]
    cos_powers = list(range(margin, -1, -2))
    for n in range(margin // 2 + 1):
        sign = 1.0 if n % 2 == 0 else -1.0
        cos_m_theta = cos_m_theta + sign * C_m_2n[n] * (cos_theta ** cos_powers[n]) \
            * (sin2_theta ** n)
    eps = 1e-7
    cos_c = jnp.clip(cos_theta, -1.0 + eps, 1.0 - eps)
    k = jnp.floor(jnp.arccos(cos_c) / (math.pi / margin))
    updated = w_target_norm * x_norm * (((-1.0) ** k) * cos_m_theta - 2.0 * k)
    blended = (updated + beta * logit_target) / (1.0 + beta)
    return logit.at[jnp.arange(B), target].set(blended)


# ----------------------------------------------------------------------------
# Main
# ----------------------------------------------------------------------------
if __name__ == "__main__":
    key = jax.random.PRNGKey(0)
    k_w, k_x, k_t = jax.random.split(key, 3)

    B, D, C, MARGIN = 8, 32, 16, 4

    x = jax.random.normal(k_x, (B, D), dtype=jnp.float32)
    target = jax.random.randint(k_t, (B,), 0, C, dtype=jnp.int32)

    # ---- exact f32 path -----------------------------------------------------
    module = LSoftmaxLinearPallas(input_features=D, output_features=C,
                                  margin=MARGIN, key=k_w,
                                  compute_dtype=jnp.float32)
    beta_used = float(max(module.beta, module.beta_min))
    out = jax.block_until_ready(module(x, target, training=True))
    ref = _reference_forward(x, module.weight, target, MARGIN, beta_used)
    np.testing.assert_allclose(np.asarray(out), np.asarray(ref),
                               rtol=1e-4, atol=1e-4)

    # eval-mode path (tiled matmul kernel)
    out_eval = jax.block_until_ready(module(x, training=False))
    np.testing.assert_allclose(np.asarray(out_eval),
                               np.asarray(x @ module.weight),
                               rtol=1e-4, atol=1e-4)

    # ---- fast bf16 MXU path (f32 accumulation), compared against a reference that
    # ---- uses the same bf16 matmul so tolerances stay tight -------------------------
    module_bf16 = LSoftmaxLinearPallas(input_features=D, output_features=C,
                                       margin=MARGIN, key=k_w,
                                       compute_dtype=jnp.bfloat16)
    beta_used = float(max(module_bf16.beta, module_bf16.beta_min))
    out_bf16 = jax.block_until_ready(module_bf16(x, target, training=True))
    ref_bf16 = _reference_forward(x, module_bf16.weight, target, MARGIN, beta_used,
                                  matmul_dtype=jnp.bfloat16)
    np.testing.assert_allclose(np.asarray(out_bf16), np.asarray(ref_bf16),
                               rtol=1e-3, atol=1e-3)

    print("KERNEL_OK")
</pallas_src>

<mosaic_0001>
module attributes {stable_mosaic.version = 11 : i64} {
  func.func @_lsoftmax_train_kernel(%arg0: i32, %arg1: i32, %arg2: i32, %arg3: memref<16x128xf32, #tpu.memory_space<vmem>>, %arg4: memref<128x128xf32, #tpu.memory_space<vmem>>, %arg5: memref<1x128xf32, #tpu.memory_space<vmem>>, %arg6: memref<16x1xf32, #tpu.memory_space<vmem>>, %arg7: memref<16x1xi32, #tpu.memory_space<vmem>>, %arg8: memref<16x128xf32, #tpu.memory_space<vmem>>) attributes {dimension_semantics = [#tpu.dimension_semantics<parallel>, #tpu.dimension_semantics<parallel>, #tpu.dimension_semantics<arbitrary>], iteration_bounds = array<i64: 1, 1, 1>, scalar_prefetch = 0 : i64, scratch_operands = 0 : i64, tpu.core_type = #tpu.core_type<tc>, window_params = [{transform_indices = @transform_0, window_bounds = array<i64: 16, 128>}, {transform_indices = @transform_1, window_bounds = array<i64: 128, 128>}, {transform_indices = @transform_2, window_bounds = array<i64: 1, 128>}, {transform_indices = @transform_3, window_bounds = array<i64: 16, 1>}, {transform_indices = @transform_4, window_bounds = array<i64: 16, 1>}, {transform_indices = @transform_5, window_bounds = array<i64: 16, 128>}]} {
    %c128_i32 = arith.constant 128 : i32
    %0 = arith.muli %arg1, %c128_i32 : i32
    %c0_i32 = arith.constant 0 : i32
    %1 = arith.cmpi eq, %arg2, %c0_i32 : i32
    %2 = arith.extui %1 : i1 to i32
    %c0_i32_0 = arith.constant 0 : i32
    %3 = arith.cmpi ne, %2, %c0_i32_0 : i32
    scf.if %3 {
      %cst_10 = arith.constant 0.000000e+00 : f32
      %13 = vector.broadcast %cst_10 : f32 to vector<16x128xf32>
      %c0_11 = arith.constant 0 : index
      %c0_12 = arith.constant 0 : index
      %14 = vector.load %arg8[%c0_11, %c0_12] : memref<16x128xf32, #tpu.memory_space<vmem>>, vector<16x128xf32>
      tpu.vector_store %arg8[%c0_11, %c0_12], %13 {strides = array<i32>} : memref<16x128xf32, #tpu.memory_space<vmem>>, vector<16x128xf32>,
    } else {
    }
    %c0 = arith.constant 0 : index
    %c0_1 = arith.constant 0 : index
    %4 = vector.load %arg8[%c0, %c0_1] : memref<16x128xf32, #tpu.memory_space<vmem>>, vector<16x128xf32>
    %c0_2 = arith.constant 0 : index
    %c0_3 = arith.constant 0 : index
    %5 = vector.load %arg3[%c0_2, %c0_3] : memref<16x128xf32, #tpu.memory_space<vmem>>, vector<16x128xf32>
    %c0_4 = arith.constant 0 : index
    %c0_5 = arith.constant 0 : index
    %6 = vector.load %arg4[%c0_4, %c0_5] : memref<128x128xf32, #tpu.memory_space<vmem>>, vector<128x128xf32>
    %cst = arith.constant dense<0.000000e+00> : vector<16x128xf32>
    %7 = tpu.matmul %5, %6, %cst {dimension_numbers = #tpu.dot_dimension_numbers<[1], [0], [0], [1], [0, 0, 1, 1], [], []>} : vector<16x128xf32>, vector<128x128xf32>, vector<16x128xf32> -> vector<16x128xf32>
    %8 = arith.addf %4, %7 : vector<16x128xf32>
    %c0_6 = arith.constant 0 : index
    %c0_7 = arith.constant 0 : index
    %9 = vector.load %arg8[%c0_6, %c0_7] : memref<16x128xf32, #tpu.memory_space<vmem>>, vector<16x128xf32>
    tpu.vector_store %arg8[%c0_6, %c0_7], %8 {strides = array<i32>} : memref<16x128xf32, #tpu.memory_space<vmem>>, vector<16x128xf32>,
    %c0_i32_8 = arith.constant 0 : i32
    %10 = arith.cmpi eq, %arg2, %c0_i32_8 : i32
    %11 = arith.extui %10 : i1 to i32
    %c0_i32_9 = arith.constant 0 : i32
    %12 = arith.cmpi ne, %11, %c0_i32_9 : i32
    scf.if %12 {
      %c0_10 = arith.constant 0 : index
      %c0_11 = arith.constant 0 : index
      %13 = vector.load %arg8[%c0_10, %c0_11] : memref<16x128xf32, #tpu.memory_space<vmem>>, vector<16x128xf32>
      %14 = tpu.iota {dimensions = array<i32: 1>} : vector<16x128xi32>
      %15 = vector.broadcast %0 : i32 to vector<16x128xi32>
      %16 = arith.addi %14, %15 : vector<16x128xi32>
      %c0_12 = arith.constant 0 : index
      %c0_13 = arith.constant 0 : index
      %17 = vector.load %arg7[%c0_12, %c0_13] : memref<16x1xi32, #tpu.memory_space<vmem>>, vector<16x1xi32>
      %18 = vector.broadcast %17 : vector<16x1xi32> to vector<16x128xi32>
      %19 = arith.cmpi eq, %16, %18 : vector<16x128xi32>
      %cst_14 = arith.constant 0.000000e+00 : f32
      %20 = vector.broadcast %cst_14 : f32 to vector<16x128xf32>
      %21 = arith.select %19, %13, %20 : vector<16x128xi1>, vector<16x128xf32>
      %cst_15 = arith.constant dense<0.000000e+00> : vector<16xf32>
      %22 = vector.multi_reduction <add>, %21, %cst_15 [1] : vector<16x128xf32> to vector<16xf32>
      %23 = vector.shape_cast %22 : vector<16xf32> to vector<16x1xf32>
      %c0_16 = arith.constant 0 : index
      %c0_17 = arith.constant 0 : index
      %24 = vector.load %arg5[%c0_16, %c0_17] : memref<1x128xf32, #tpu.memory_space<vmem>>, vector<1x128xf32>
      %cst_18 = arith.constant 0.000000e+00 : f32
      %25 = vector.shape_cast %24 : vector<1x128xf32> to vector<1x128xf32>
      %26 = vector.broadcast %25 : vector<1x128xf32> to vector<16x128xf32>
      %27 = vector.broadcast %cst_18 : f32 to vector<16x128xf32>
      %28 = arith.select %19, %26, %27 : vector<16x128xi1>, vector<16x128xf32>
      %cst_19 = arith.constant dense<0.000000e+00> : vector<16xf32>
      %29 = vector.multi_reduction <add>, %28, %cst_19 [1] : vector<16x128xf32> to vector<16xf32>
      %30 = vector.shape_cast %29 : vector<16xf32> to vector<16x1xf32>
      %c0_20 = arith.constant 0 : index
      %c0_21 = arith.constant 0 : index
      %31 = vector.load %arg6[%c0_20, %c0_21] : memref<16x1xf32, #tpu.memory_space<vmem>>, vector<16x1xf32>
      %32 = arith.mulf %30, %31 : vector<16x1xf32>
      %cst_22 = arith.constant 1.000000e-10 : f32
      %33 = vector.broadcast %cst_22 : f32 to vector<16x1xf32>
      %34 = arith.addf %32, %33 : vector<16x1xf32>
      %35 = arith.divf %23, %34 : vector<16x1xf32>
      %36 = arith.mulf %35, %35 : vector<16x1xf32>
      %cst_23 = arith.constant 1.000000e+00 : f32
      %37 = vector.broadcast %cst_23 : f32 to vector<16x1xf32>
      %38 = arith.subf %37, %36 : vector<16x1xf32>
      %cst_24 = arith.constant 0.000000e+00 : f32
      %39 = vector.broadcast %cst_24 : f32 to vector<16x1xf32>
      %40 = arith.mulf %35, %35 : vector<16x1xf32>
      %41 = arith.mulf %40, %40 : vector<16x1xf32>
      %cst_25 = arith.constant 1.000000e+00 : f32
      %42 = vector.broadcast %cst_25 : f32 to vector<16x1xf32>
      %43 = arith.mulf %42, %41 : vector<16x1xf32>
      %cst_26 = arith.constant 1.000000e+00 : f32
      %44 = vector.broadcast %cst_26 : f32 to vector<16x1xf32>
      %45 = arith.mulf %43, %44 : vector<16x1xf32>
      %46 = arith.addf %39, %45 : vector<16x1xf32>
      %47 = arith.mulf %35, %35 : vector<16x1xf32>
      %cst_27 = arith.constant -6.000000e+00 : f32
      %48 = vector.broadcast %cst_27 : f32 to vector<16x1xf32>
      %49 = arith.mulf %48, %47 : vector<16x1xf32>
      %50 = arith.mulf %49, %38 : vector<16x1xf32>
      %51 = arith.addf %46, %50 : vector<16x1xf32>
      %cst_28 = arith.constant 1.000000e+00 : f32
      %52 = vector.broadcast %cst_28 : f32 to vector<16x1xf32>
      %cst_29 = arith.constant 1.000000e+00 : f32
      %53 = vector.broadcast %cst_29 : f32 to vector<16x1xf32>
      %54 = arith.mulf %53, %52 : vector<16x1xf32>
      %55 = arith.mulf %38, %38 : vector<16x1xf32>
      %56 = arith.mulf %54, %55 : vector<16x1xf32>
      %57 = arith.addf %51, %56 : vector<16x1xf32>
      %cst_30 = arith.constant -0.99999988 : f32
      %cst_31 = arith.constant 0.99999988 : f32
      %58 = vector.broadcast %cst_30 : f32 to vector<16x1xf32>
      %59 = arith.maximumf %58, %35 : vector<16x1xf32>
      %60 = vector.broadcast %cst_31 : f32 to vector<16x1xf32>
      %61 = arith.minimumf %60, %59 : vector<16x1xf32>
      %cst_32 = arith.constant 0.000000e+00 : f32
      %62 = vector.broadcast %cst_32 : f32 to vector<16x1xf32>
      %cst_33 = arith.constant 0.707106769 : f32
      %63 = vector.broadcast %cst_33 : f32 to vector<16x1xf32>
      %64 = arith.cmpf ole, %61, %63 : vector<16x1xf32>
      %65 = arith.extui %64 : vector<16x1xi1> to vector<16x1xi32>
      %66 = arith.sitofp %65 : vector<16x1xi32> to vector<16x1xf32>
      %67 = arith.addf %62, %66 : vector<16x1xf32>
      %cst_34 = arith.constant 6.12323426E-17 : f32
      %68 = vector.broadcast %cst_34 : f32 to vector<16x1xf32>
      %69 = arith.cmpf ole, %61, %68 : vector<16x1xf32>
      %70 = arith.extui %69 : vector<16x1xi1> to vector<16x1xi32>
      %71 = arith.sitofp %70 : vector<16x1xi32> to vector<16x1xf32>
      %72 = arith.addf %67, %71 : vector<16x1xf32>
      %cst_35 = arith.constant -0.707106769 : f32
      %73 = vector.broadcast %cst_35 : f32 to vector<16x1xf32>
      %74 = arith.cmpf ole, %61, %73 : vector<16x1xf32>
      %75 = arith.extui %74 : vector<16x1xi1> to vector<16x1xi32>
      %76 = arith.sitofp %75 : vector<16x1xi32> to vector<16x1xf32>
      %77 = arith.addf %72, %76 : vector<16x1xf32>
      %cst_36 = arith.constant 5.000000e-01 : f32
      %78 = vector.broadcast %cst_36 : f32 to vector<16x1xf32>
      %79 = arith.mulf %77, %78 : vector<16x1xf32>
      %80 = math.floor %79 : vector<16x1xf32>
      %cst_37 = arith.constant 2.000000e+00 : f32
      %81 = vector.broadcast %cst_37 : f32 to vector<16x1xf32>
      %82 = arith.mulf %81, %80 : vector<16x1xf32>
      %83 = arith.subf %77, %82 : vector<16x1xf32>
      %cst_38 = arith.constant 2.000000e+00 : f32
      %84 = vector.broadcast %cst_38 : f32 to vector<16x1xf32>
      %85 = arith.mulf %84, %83 : vector<16x1xf32>
      %cst_39 = arith.constant 1.000000e+00 : f32
      %86 = vector.broadcast %cst_39 : f32 to vector<16x1xf32>
      %87 = arith.subf %86, %85 : vector<16x1xf32>
      %88 = arith.mulf %30, %31 : vector<16x1xf32>
      %89 = arith.mulf %87, %57 : vector<16x1xf32>
      %cst_40 = arith.constant 2.000000e+00 : f32
      %90 = vector.broadcast %cst_40 : f32 to vector<16x1xf32>
      %91 = arith.mulf %90, %77 : vector<16x1xf32>
      %92 = arith.subf %89, %91 : vector<16x1xf32>
      %93 = arith.mulf %88, %92 : vector<16x1xf32>
      %cst_41 = arith.constant 1.000000e+02 : f32
      %94 = vector.broadcast %cst_41 : f32 to vector<16x1xf32>
      %95 = arith.mulf %94, %23 : vector<16x1xf32>
      %96 = arith.addf %93, %95 : vector<16x1xf32>
      %cst_42 = arith.constant 1.010000e+02 : f32
      %97 = vector.broadcast %cst_42 : f32 to vector<16x1xf32>
      %98 = arith.divf %96, %97 : vector<16x1xf32>
      %99 = vector.shape_cast %98 : vector<16x1xf32> to vector<16x1xf32>
      %100 = vector.broadcast %99 : vector<16x1xf32> to vector<16x128xf32>
      %101 = arith.select %19, %100, %13 : vector<16x128xi1>, vector<16x128xf32>
      %c0_43 = arith.constant 0 : index
      %c0_44 = arith.constant 0 : index
      %102 = vector.load %arg8[%c0_43, %c0_44] : memref<16x128xf32, #tpu.memory_space<vmem>>, vector<16x128xf32>
      tpu.vector_store %arg8[%c0_43, %c0_44], %101 {strides = array<i32>} : memref<16x128xf32, #tpu.memory_space<vmem>>, vector<16x128xf32>,
    } else {
    }
    return
  }
  func.func @transform_0(%arg0: i32, %arg1: i32, %arg2: i32) -> (i32, i32) {
    %c0_i32 = arith.constant 0 : i32
    return %arg0, %arg2 : i32, i32
  }
  func.func @transform_1(%arg0: i32, %arg1: i32, %arg2: i32) -> (i32, i32) {
    %c0_i32 = arith.constant 0 : i32
    return %arg2, %arg1 : i32, i32
  }
  func.func @transform_2(%arg0: i32, %arg1: i32, %arg2: i32) -> (i32, i32) {
    %c0_i32 = arith.constant 0 : i32
    %c0_i32_0 = arith.constant 0 : i32
    return %c0_i32, %arg1 : i32, i32
  }
  func.func @transform_3(%arg0: i32, %arg1: i32, %arg2: i32) -> (i32, i32) {
    %c0_i32 = arith.constant 0 : i32
    %c0_i32_0 = arith.constant 0 : i32
    return %arg0, %c0_i32 : i32, i32
  }
  func.func @transform_4(%arg0: i32, %arg1: i32, %arg2: i32) -> (i32, i32) {
    %c0_i32 = arith.constant 0 : i32
    %c0_i32_0 = arith.constant 0 : i32
    return %arg0, %c0_i32 : i32, i32
  }
  func.func @transform_5(%arg0: i32, %arg1: i32, %arg2: i32) -> (i32, i32) {
    %c0_i32 = arith.constant 0 : i32
    return %arg0, %arg1 : i32, i32
  }
}

</mosaic_0001>

<llo_original>
// kernel: tpu_custom_call.1
$region0: #{tpu_custom_call.1}
  #allocation0 [shape = 'u32[]', space=smem, size = 0x4, offset = 0x4, fixed_abs, tag = 'smem constant byte address 0x4 - core index']
  #allocation1 [shape = 'u32[144,128]{1,0:T(1,128)}', space=vmem, size = 0x12000, scoped, tag = 'internal scratch']
  %s0 = inlined_call_operand.hbm [shape: f32[16,128], index: 0, kind: input, shape index: {}]
  %s1 = inlined_call_operand.hbm [shape: f32[128,128], index: 1, kind: input, shape index: {}]
  %s2 = inlined_call_operand.hbm [shape: f32[1,128], index: 2, kind: input, shape index: {}]
  %s3 = inlined_call_operand.hbm [shape: f32[16,1], index: 3, kind: input, shape index: {}]
  %s4 = inlined_call_operand.hbm [shape: s32[16,1], index: 4, kind: input, shape index: {}]
  %s5 = inlined_call_operand.hbm [shape: f32[16,128], index: 5, kind: output, shape index: {}]
  %s6 = sld [smem:[#allocation0]]
  $region58: #{tpu_custom_call.1} parent=0
    _
  %s8 = ssub.s32 1, %s6
  %s9 = scalar_select 0, %s8, %s6
  $region1: #{tpu_custom_call.1} parent=0
    #allocation2 [shape = 'u8[8192]{0}', space=vmem, size = 0x2000, scoped, tag = 'input window, operand 0, single buffered']
    #allocation3 [shape = 's32[1]{0}', space=sflag, size = 0x4, scoped, tag = 'scoped memory for tpu_custom_call.1']
    #allocation4 [shape = 's32[1]{0}', space=sflag, size = 0x4, scoped, tag = 'scoped memory for tpu_custom_call.1']
    #allocation5 [shape = 'u8[65536]{0}', space=vmem, size = 0x10000, scoped, tag = 'input window, operand 1, single buffered']
    #allocation6 [shape = 's32[1]{0}', space=sflag, size = 0x4, scoped, tag = 'scoped memory for tpu_custom_call.1']
    #allocation7 [shape = 'u8[512]{0}', space=vmem, size = 0x400, scoped, tag = 'input window, operand 2, single buffered']
    #allocation8 [shape = 'u8[8192]{0}', space=vmem, size = 0x2000, scoped, tag = 'input window, operand 3, single buffered']
    #allocation9 [shape = 's32[1]{0}', space=sflag, size = 0x4, scoped, tag = 'scoped memory for tpu_custom_call.1']
    #allocation10 [shape = 'u8[8192]{0}', space=vmem, size = 0x2000, scoped, tag = 'input window, operand 4, single buffered']
    #allocation11 [shape = 'u8[8192]{0}', space=vmem, size = 0x2000, scoped, tag = 'output window, operand 0, single buffered']
    %10 = vsyncpa [#allocation3], 0
    %11 = vsyncpa [#allocation6], 0
    %12 = vsyncpa [#allocation9], 0
    %13 = vsyncpa [#allocation4], 0
    // Predicated region
    $region2: #{tpu_custom_call.1} parent=1 // pred_check
      _
    $region3: #{tpu_custom_call.1} parent=1 // pred_check_branch
      %15 = sbr.rel (0) target = $region5
    $region4: #{tpu_custom_call.1} parent=1 // pred_region
      %s17 = ssub.s32 256, 256
      %18 = vsyncadd [#allocation3], %s17
      %s19 = sshll.u32 [#allocation2], 4
      %s20 = int_to_ptr.vmem [resolvable:$true] %s19
      %25 = dma.hbm_to_vmem [thread:$0]  %s0, 256, %s20, [#allocation3], 128, 128, 8
    $region5: #{tpu_custom_call.1} parent=1 // pred_fallthru
      _
    // Predicated region
    $region6: #{tpu_custom_call.1} parent=1 // pred_check
      _
    $region7: #{tpu_custom_call.1} parent=1 // pred_check_branch
      %27 = sbr.rel (0) target = $region9
    $region8: #{tpu_custom_call.1} parent=1 // pred_region
      %s29 = ssub.s32 2048, 2048
      %30 = vsyncadd [#allocation6], %s29
      %s31 = sshll.u32 [#allocation5], 4
      %s32 = int_to_ptr.vmem [resolvable:$true] %s31
      %37 = dma.hbm_to_vmem [thread:$0]  %s1, 2048, %s32, [#allocation6], 128, 128, 8
    $region9: #{tpu_custom_call.1} parent=1 // pred_fallthru
      _
    // Predicated region
    $region10: #{tpu_custom_call.1} parent=1 // pred_check
      _
    $region11: #{tpu_custom_call.1} parent=1 // pred_check_branch
      %39 = sbr.rel (0) target = $region13
    $region12: #{tpu_custom_call.1} parent=1 // pred_region
      %s41 = ssub.s32 16, 16
      %42 = vsyncadd [#allocation6], %s41
      %s44 = sshll.u32 [#allocation7], 4
      %s45 = int_to_ptr.vmem [resolvable:$true] %s44
      %47 = dma.hbm_to_vmem [thread:$0]  %s2, 16, %s45, [#allocation6]
    $region13: #{tpu_custom_call.1} parent=1 // pred_fallthru
      _
    // Predicated region
    $region14: #{tpu_custom_call.1} parent=1 // pred_check
      _
    $region15: #{tpu_custom_call.1} parent=1 // pred_check_branch
      %49 = sbr.rel (0) target = $region17
    $region16: #{tpu_custom_call.1} parent=1 // pred_region
      %s51 = ssub.s32 256, 256
      %52 = vsyncadd [#allocation9], %s51
      %s53 = sshll.u32 [#allocation8], 4
      %s54 = int_to_ptr.vmem [resolvable:$true] %s53
      %59 = dma.hbm_to_vmem [thread:$0]  %s3, 256, %s54, [#allocation9], 128, 128, 8
    $region17: #{tpu_custom_call.1} parent=1 // pred_fallthru
      _
    // Predicated region
    $region18: #{tpu_custom_call.1} parent=1 // pred_check
      _
    $region19: #{tpu_custom_call.1} parent=1 // pred_check_branch
      %61 = sbr.rel (0) target = $region21
    $region20: #{tpu_custom_call.1} parent=1 // pred_region
      %s63 = ssub.s32 256, 256
      %64 = vsyncadd [#allocation9], %s63
      %s65 = sshll.u32 [#allocation10], 4
      %s66 = int_to_ptr.vmem [resolvable:$true] %s65
      %71 = dma.hbm_to_vmem [thread:$0]  %s4, 256, %s66, [#allocation9], 128, 128, 8
    $region21: #{tpu_custom_call.1} parent=1 // pred_fallthru
      _
    // Predicated region
    $region22: #{tpu_custom_call.1} parent=1 // pred_check
      _
    $region23: #{tpu_custom_call.1} parent=1 // pred_check_branch
      %73 = sbr.rel (0) target = $region25
    $region24: #{tpu_custom_call.1} parent=1 // pred_region
      %74 = dma.done [#allocation3], 256
    $region25: #{tpu_custom_call.1} parent=1 // pred_fallthru
      _
    // Predicated region
    $region26: #{tpu_custom_call.1} parent=1 // pred_check
      _
    $region27: #{tpu_custom_call.1} parent=1 // pred_check_branch
      %76 = sbr.rel (0) target = $region29
    $region28: #{tpu_custom_call.1} parent=1 // pred_region
      %77 = dma.done [#allocation6], 2048
    $region29: #{tpu_custom_call.1} parent=1 // pred_fallthru
      _
    // Predicated region
    $region30: #{tpu_custom_call.1} parent=1 // pred_check
      _
    $region31: #{tpu_custom_call.1} parent=1 // pred_check_branch
      %79 = sbr.rel (0) target = $region33
    $region32: #{tpu_custom_call.1} parent=1 // pred_region
      %80 = dma.done [#allocation6], 16
    $region33: #{tpu_custom_call.1} parent=1 // pred_fallthru
      _
    // Predicated region
    $region34: #{tpu_custom_call.1} parent=1 // pred_check
      _
    $region35: #{tpu_custom_call.1} parent=1 // pred_check_branch
      %82 = sbr.rel (0) target = $region37
    $region36: #{tpu_custom_call.1} parent=1 // pred_region
      %83 = dma.done [#allocation9], 256
    $region37: #{tpu_custom_call.1} parent=1 // pred_fallthru
      _
    // Predicated region
    $region38: #{tpu_custom_call.1} parent=1 // pred_check
      _
    $region39: #{tpu_custom_call.1} parent=1 // pred_check_branch
      %85 = sbr.rel (0) target = $region41
    $region40: #{tpu_custom_call.1} parent=1 // pred_region
      %86 = dma.done [#allocation9], 256
    $region41: #{tpu_custom_call.1} parent=1 // pred_fallthru
      _
    %s87 = smul.u32 0, 128
    %p88 = scmp.eq.s32.totalorder 0, 0
    // Predicated region
    $region42: #{tpu_custom_call.1} parent=1 // pred_check
      %p89 = pneg %p88
    $region43: #{tpu_custom_call.1} parent=1 // pred_check_branch
      %91 = sbr.rel (%p89) target = $region45
    $region44: #{tpu_custom_call.1} parent=1 // pred_region
      %92 = vst [vmem:[#allocation11] sm:$0xff] 0.0
      %93 = vst [vmem:[#allocation11 + $0x8] sm:$0xff] 0.0
    $region45: #{tpu_custom_call.1} parent=1 // pred_fallthru
      _
    %v94 = vld [vmem:[#allocation11] sm:$0xff]
    %v95 = vld [vmem:[#allocation11 + $0x8] sm:$0xff]
    %v96 = vld [vmem:[#allocation2] sm:$0xff]
    %v97 = vld [vmem:[#allocation2 + $0x8] sm:$0xff]
    %v98 = vld [vmem:[#allocation5] sm:$0xff]
    %v99 = vld [vmem:[#allocation5 + $0x8] sm:$0xff]
    %v100 = vld [vmem:[#allocation5 + $0x10] sm:$0xff]
    %v101 = vld [vmem:[#allocation5 + $0x18] sm:$0xff]
    %v102 = vld [vmem:[#allocation5 + $0x20] sm:$0xff]
    %v103 = vld [vmem:[#allocation5 + $0x28] sm:$0xff]
    %v104 = vld [vmem:[#allocation5 + $0x30] sm:$0xff]
    %v105 = vld [vmem:[#allocation5 + $0x38] sm:$0xff]
    %v106 = vld [vmem:[#allocation5 + $0x40] sm:$0xff]
    %v107 = vld [vmem:[#allocation5 + $0x48] sm:$0xff]
    %v108 = vld [vmem:[#allocation5 + $0x50] sm:$0xff]
    %v109 = vld [vmem:[#allocation5 + $0x58] sm:$0xff]
    %v110 = vld [vmem:[#allocation5 + $0x60] sm:$0xff]
    %v111 = vld [vmem:[#allocation5 + $0x68] sm:$0xff]
    %v112 = vld [vmem:[#allocation5 + $0x70] sm:$0xff]
    %v113 = vld [vmem:[#allocation5 + $0x78] sm:$0xff]
    %114 = vmatprep.subr.mxu0 0.0
    %115 = vmatpush1.msra.mxu0 %v98
    %116 = vmatprep.subr.mxu0 0.0
    %117 = vmatpush1.msra.mxu0 %v99
    %118 = vmatprep.subr.mxu0 0.0
    %119 = vmatpush1.msra.mxu0 %v100
    %120 = vmatprep.subr.mxu0 0.0
    %121 = vmatpush1.msra.mxu0 %v101
    %122 = vmatprep.subr.mxu0 0.0
    %123 = vmatpush1.msra.mxu0 %v102
    %124 = vmatprep.subr.mxu0 0.0
    %125 = vmatpush1.msra.mxu0 %v103
    %126 = vmatprep.subr.mxu0 0.0
    %127 = vmatpush1.msra.mxu0 %v104
    %128 = vmatprep.subr.mxu0 0.0
    %129 = vmatpush1.msra.mxu0 %v105
    %130 = vmatprep.subr.mxu0 0.0
    %131 = vmatpush1.msra.mxu0 %v106
    %132 = vmatprep.subr.mxu0 0.0
    %133 = vmatpush1.msra.mxu0 %v107
    %134 = vmatprep.subr.mxu0 0.0
    %135 = vmatpush1.msra.mxu0 %v108
    %136 = vmatprep.subr.mxu0 0.0
    %137 = vmatpush1.msra.mxu0 %v109
    %138 = vmatprep.subr.mxu0 0.0
    %139 = vmatpush1.msra.mxu0 %v110
    %140 = vmatprep.subr.mxu0 0.0
    %141 = vmatpush1.msra.mxu0 %v111
    %142 = vmatprep.subr.mxu0 0.0
    %143 = vmatpush1.msra.mxu0 %v112
    %144 = vmatprep.subr.mxu0 0.0
    %145 = vmatpush1.msra.mxu0 %v113
    %146 = vmatprep.subr.mxu0 0.0
    %147 = vmatpush1.msra.mxu0 0.0
    %148 = vmatprep.subr.mxu0 0.0
    %149 = vmatpush1.msra.mxu0 0.0
    %150 = vmatprep.subr.mxu0 0.0
    %151 = vmatpush1.msra.mxu0 0.0
    %152 = vmatprep.subr.mxu0 0.0
    %153 = vmatpush1.msra.mxu0 0.0
    %154 = vmatprep.subr.mxu0 0.0
    %155 = vmatpush1.msra.mxu0 0.0
    %156 = vmatprep.subr.mxu0 0.0
    %157 = vmatpush1.msra.mxu0 0.0
    %158 = vmatprep.subr.mxu0 0.0
    %159 = vmatpush1.msra.mxu0 0.0
    %160 = vmatprep.subr.mxu0 0.0
    %161 = vmatpush1.msra.mxu0 0.0
    %162 = vmatprep.subr.mxu0 0.0
    %163 = vmatpush1.msra.mxu0 0.0
    %164 = vmatprep.subr.mxu0 0.0
    %165 = vmatpush1.msra.mxu0 0.0
    %166 = vmatprep.subr.mxu0 0.0
    %167 = vmatpush1.msra.mxu0 0.0
    %168 = vmatprep.subr.mxu0 0.0
    %169 = vmatpush1.msra.mxu0 0.0
    %170 = vmatprep.subr.mxu0 0.0
    %171 = vmatpush1.msra.mxu0 0.0
    %172 = vmatprep.subr.mxu0 0.0
    %173 = vmatpush1.msra.mxu0 0.0
    %174 = vmatprep.subr.mxu0 0.0
    %175 = vmatpush1.msra.mxu0 0.0
    %176 = vmatprep.subr.mxu0 0.0
    %177 = vmatpush1.msra.mxu0 0.0
    %178 = vmatprep.mubr.f32.mxu0 0.0
    %179 = vmatmul.mubr.f32.gmra.mrb[0].mxu0 %v96
    %v180 = vpop.f32.mrb[0].mxu0
    %v181 = vadd.f32 0.0, %v180
    %v182 = vpop.f32.mrb[0].mxu0
    %183 = vmatprep.mubr.f32.mxu0 0.0
    %184 = vmatmul.mubr.f32.gmra.mrb[0].mxu0 %v97
    %v185 = vpop.f32.mrb[0].mxu0
    %v186 = vadd.f32 0.0, %v185
    %v187 = vpop.f32.mrb[0].mxu0
    %188 = vdwg.mxu0
    %v189 = vadd.f32 %v94, %v181
    %v190 = vadd.f32 %v95, %v186
    %191 = vst [vmem:[#allocation11] sm:$0xff] %v189
    %192 = vst [vmem:[#allocation11 + $0x8] sm:$0xff] %v190
    // Predicated region
    $region46: #{tpu_custom_call.1} parent=1 // pred_check
      %p193 = pneg %p88
    $region47: #{tpu_custom_call.1} parent=1 // pred_check_branch
      %195 = sbr.rel (%p193) target = $region49
    $region48: #{tpu_custom_call.1} parent=1 // pred_region
      %v196 = vld [vmem:[#allocation11] sm:$0xff]
      %v197 = vld [vmem:[#allocation11 + $0x8] sm:$0xff]
      %v198 = vlaneseq
      %v199 = vand.u32 %v198, 127
      %v200 = vstv %s87
      %v201 = vadd.s32 %v199, %v200
      %v202 = vld [vmem:[#allocation10] sm:$0xff]
      %v203 = vld [vmem:[#allocation10 + $0x8] sm:$0xff]
      %204 = vset.pattern.permute.xlu0 0
      %205 = vperm.xlu0 %204, %v202
      %v206 = vpop.permute.xlu0 %205
      %207 = vset.pattern.permute.xlu0 0
      %208 = vperm.xlu0 %207, %v203
      %v209 = vpop.permute.xlu0 %208
      %vm210 = vcmp.eq.s32.totalorder %v201, %v206
      %vm211 = vcmp.eq.s32.totalorder %v201, %v209
      %v212 = vsel %vm210, %v196, 0.0
      %v213 = vsel %vm211, %v197, 0.0
      %214 = vadd.xlane.f32.xlu0 %v212
      %v215 = vpop.xlane.xlu0 %214
      %216 = vadd.xlane.f32.xlu0 %v213
      %v217 = vpop.xlane.xlu0 %216
      %v218 = vld [vmem:[#allocation7] sm:$0x1]
      %v220 = vlaneseq
      %v221 = vshrl.u32 %v220, 7
      %v222 = vsub.s32 0, %v221
      %v223 = vrot.slane %v218, %v222
      %v225 = vsel %vm210, %v223, 0.0
      %v226 = vsel %vm211, %v223, 0.0
      %227 = vadd.xlane.f32.xlu0 %v225
      %v228 = vpop.xlane.xlu0 %227
      %229 = vadd.xlane.f32.xlu0 %v226
      %v230 = vpop.xlane.xlu0 %229
      %v231 = vld [vmem:[#allocation8] sm:$0xff]
      %v232 = vld [vmem:[#allocation8 + $0x8] sm:$0xff]
      %v233 = vmul.f32 %v228, %v231
      %v234 = vmul.f32 %v230, %v232
      %v235 = vadd.f32 %v233, 1e-10
      %v236 = vadd.f32 %v234, 1e-10
      %v237 = vrcp.pop %v235
      %v238 = vmul.f32 %v215, %v237
      %v239 = vrcp.pop %v236
      %v240 = vmul.f32 %v217, %v239
      %v241 = vmul.f32 %v238, %v238
      %v242 = vmul.f32 %v240, %v240
      %v243 = vsub.f32 1.0, %v241
      %v244 = vsub.f32 1.0, %v242
      %v245 = vmul.f32 %v241, %v241
      %v246 = vmul.f32 %v242, %v242
      %v247 = vadd.f32 %v245, 0.0
      %v248 = vadd.f32 %v246, 0.0
      %v249 = vmul.f32 %v241, -6.0
      %v250 = vmul.f32 %v242, -6.0
      %v251 = vmul.f32 %v249, %v243
      %v252 = vmul.f32 %v250, %v244
      %v253 = vadd.f32 %v247, %v251
      %v254 = vadd.f32 %v248, %v252
      %v255 = vmul.f32 %v243, %v243
      %v256 = vmul.f32 %v244, %v244
      %v257 = vadd.f32 %v253, %v255
      %v258 = vadd.f32 %v254, %v256
      %v259 = vmax.f32 %v238, -0.9999999
      %v260 = vmax.f32 %v240, -0.9999999
      %v261 = vmin.f32 %v259, 0.9999999
      %v262 = vmin.f32 %v260, 0.9999999
      %vm263 = vcmp.le.f32.partialorder %v261, 0.70710677
      %vm264 = vcmp.le.f32.partialorder %v262, 0.70710677
      %v265 = vsel %vm263, 1, 0
      %v266 = vsel %vm264, 1, 0
      %v267 = vcvt.s32.f32 %v265
      %v268 = vcvt.s32.f32 %v266
      %v269 = vadd.f32 %v267, 0.0
      %v270 = vadd.f32 %v268, 0.0
      %vm271 = vcmp.le.f32.partialorder %v261, 6.123234e-17
      %vm272 = vcmp.le.f32.partialorder %v262, 6.123234e-17
      %v273 = vsel %vm271, 1, 0
      %v274 = vsel %vm272, 1, 0
      %v275 = vcvt.s32.f32 %v273
      %v276 = vcvt.s32.f32 %v274
      %v277 = vadd.f32 %v269, %v275
      %v278 = vadd.f32 %v270, %v276
      %vm279 = vcmp.le.f32.partialorder %v261, -0.70710677
      %vm280 = vcmp.le.f32.partialorder %v262, -0.70710677
      %v281 = vsel %vm279, 1, 0
      %v282 = vsel %vm280, 1, 0
      %v283 = vcvt.s32.f32 %v281
      %v284 = vcvt.s32.f32 %v282
      %v285 = vadd.f32 %v277, %v283
      %v286 = vadd.f32 %v278, %v284
      %v287 = vmul.f32 %v285, 0.5
      %v288 = vmul.f32 %v286, 0.5
      %v289 = vfloor.f32 %v287
      %v290 = vfloor.f32 %v288
      %v291 = vmul.f32 %v289, 2.0
      %v292 = vmul.f32 %v290, 2.0
      %v293 = vsub.f32 %v285, %v291
      %v294 = vsub.f32 %v286, %v292
      %v295 = vmul.f32 %v293, 2.0
      %v296 = vmul.f32 %v294, 2.0
      %v297 = vsub.f32 1.0, %v295
      %v298 = vsub.f32 1.0, %v296
      %v299 = vmul.f32 %v297, %v257
      %v300 = vmul.f32 %v298, %v258
      %v301 = vmul.f32 %v285, 2.0
      %v302 = vmul.f32 %v286, 2.0
      %v303 = vsub.f32 %v299, %v301
      %v304 = vsub.f32 %v300, %v302
      %v305 = vmul.f32 %v233, %v303
      %v306 = vmul.f32 %v234, %v304
      %v307 = vmul.f32 %v215, 100.0
      %v308 = vmul.f32 %v217, 100.0
      %v309 = vadd.f32 %v305, %v307
      %v310 = vadd.f32 %v306, %v308
      %v311 = vrcp.pop 101.0
      %v312 = vmul.f32 %v309, %v311
      %v313 = vmul.f32 %v310, %v311
      %315 = vset.pattern.permute.xlu0 0
      %316 = vperm.xlu0 %315, %v312
      %v317 = vpop.permute.xlu0 %316
      %320 = vset.pattern.permute.xlu0 0
      %321 = vperm.xlu0 %320, %v313
      %v322 = vpop.permute.xlu0 %321
      %v324 = vsel %vm210, %v317, %v196
      %v325 = vsel %vm211, %v322, %v197
      %326 = vst [vmem:[#allocation11] sm:$0xff] %v324
      %327 = vst [vmem:[#allocation11 + $0x8] sm:$0xff] %v325
    $region49: #{tpu_custom_call.1} parent=1 // pred_fallthru
      _
    // Predicated region
    $region50: #{tpu_custom_call.1} parent=1 // pred_check
      _
    $region51: #{tpu_custom_call.1} parent=1 // pred_check_branch
      %329 = sbr.rel (0) target = $region53
    $region52: #{tpu_custom_call.1} parent=1 // pred_region
      %s331 = ssub.s32 256, 256
      %332 = vsyncadd [#allocation4], %s331
      %s333 = sshll.u32 [#allocation11], 4
      %s334 = int_to_ptr.vmem [resolvable:$true] %s333
      %339 = dma.vmem_to_hbm [thread:$0]  %s334, 256, %s5, [#allocation4], 128, 128, 8
    $region53: #{tpu_custom_call.1} parent=1 // pred_fallthru
      _
    // Predicated region
    $region54: #{tpu_custom_call.1} parent=1 // pred_check
      _
    $region55: #{tpu_custom_call.1} parent=1 // pred_check_branch
      %341 = sbr.rel (0) target = $region57
    $region56: #{tpu_custom_call.1} parent=1 // pred_region
      %342 = dma.done [#allocation4], 256
    $region57: #{tpu_custom_call.1} parent=1 // pred_fallthru
      _
    %343 = vsyncpa [#allocation3], 1
    %344 = vsyncpa [#allocation6], 1
    %345 = vsyncpa [#allocation9], 1
    %346 = vsyncpa [#allocation4], 1

</llo_original>
